<compile_context>
chip_gen: v6e
topology: v6e:2x2x1
jax: 0.10.0
libtpu: 0.0.40
codegen_flags: <defaults>
</compile_context>

<pallas_src>
import jax
import jax.numpy as jnp
from jax.experimental import pallas as pl
from jax.experimental.pallas import tpu as pltpu


def _make_chain_kernel(stage_is_final, tile_r):
    """Kernel factory for a fused chain of Bitparm stages.

    Call layout: kernel(x_ref, p0, p1, ..., pK, o_ref) where the p* refs are
    resident (NC_pad, 1) f32 per-row parameter columns, in stage order:
        non-final stage -> softplus(h), b, tanh(a)
        final stage     -> softplus(h), b
    """
    row_aligned = (tile_r % 8 == 0)

    def kernel(x_ref, *refs):
        o_ref = refs[-1]
        params = refs[:-1]
        r0 = pl.program_id(0) * tile_r
        if row_aligned:
            r0 = pl.multiple_of(r0, 8)
        # Compute in f32 regardless of I/O dtype (free: kernel is mem-bound).
        x = x_ref[...].astype(jnp.float32)
        idx = 0
        for is_final in stage_is_final:
            sph = params[idx][pl.ds(r0, tile_r), :]      # (tile_r, 1) f32
            bb = params[idx + 1][pl.ds(r0, tile_r), :]
            t = x * sph + bb
            if is_final:
                # sigmoid(z) == 0.5 * tanh(0.5*z) + 0.5  (single EUP op)
                x = 0.5 * jnp.tanh(0.5 * t) + 0.5
                idx += 2
            else:
                ta = params[idx + 2][pl.ds(r0, tile_r), :]
                x = t + jnp.tanh(t) * ta
                idx += 3
        o_ref[...] = x.astype(o_ref.dtype)

    return kernel


def _tile_plan(NC, HW):
    """Pick lane-dense, VMEM-safe tiles with a cdiv grid (ragged edges masked)."""
    LANE_CAP = 2048
    tile_c = HW if HW <= LANE_CAP else LANE_CAP        # full dim or mult of 128
    grid_c = pl.cdiv(HW, tile_c)

    # Row axis: target ~4 MiB f32 blocks (1M elements).
    row_budget = max(8, (1 << 20) // max(tile_c, 1))
    if NC <= row_budget:
        tile_r = NC                                     # full dim (always legal)
    else:
        tile_r = max(8, (row_budget // 8) * 8)          # multiple of 8
    grid_r = pl.cdiv(NC, tile_r)

    # v7x megacore: keep >= 2 parallel blocks when the row axis allows it.
    if grid_r * grid_c == 1 and NC >= 16:
        tile_r = max(8, ((NC // 2) // 8) * 8)
        grid_r = pl.cdiv(NC, tile_r)

    return tile_r, tile_c, grid_r, grid_c


def bitparm_chain_forward(x_nchw, stages):
    """Fused forward for a chain of Bitparm stages.

    x_nchw: (N, C, H, W).
    stages: sequence of (h, b, a_or_None, final) tuples; h/b/a have shape
            (1, C, 1, 1).  A single-element list reproduces one Bitparm.
    """
    N, C, H, W = x_nchw.shape
    NC, HW = N * C, H * W
    dtype = x_nchw.dtype

    # Channel-major NCHW -> (NC, HW) is layout-preserving (no transpose).
    x2 = x_nchw.reshape(NC, HW)

    tile_r, tile_c, grid_r, grid_c = _tile_plan(NC, HW)
    NC_pad = grid_r * tile_r  # param columns padded so in-kernel pl.ds stays in-bounds

    def col(v_c):  # v_c: (C,) f32 -> resident (NC_pad, 1) column (row r -> channel r % C)
        v = jnp.tile(v_c, N)
        return jnp.pad(v, (0, NC_pad - NC)).reshape(NC_pad, 1)

    # Hoist all per-channel transcendentals out of the kernel.
    stage_is_final = []
    param_cols = []
    for (h, b, a, final) in stages:
        stage_is_final.append(bool(final))
        hc = h.reshape(C).astype(jnp.float32)
        bc = b.reshape(C).astype(jnp.float32)
        param_cols.append(col(jax.nn.softplus(hc)))
        param_cols.append(col(bc))
        if not final:
            param_cols.append(col(jnp.tanh(a.reshape(C).astype(jnp.float32))))

    x_spec = pl.BlockSpec((tile_r, tile_c), lambda i, j: (i, j))
    out_spec = pl.BlockSpec((tile_r, tile_c), lambda i, j: (i, j))
    # Resident params: full-array block with constant index -> DMA'd once,
    # stays in VMEM across all grid steps; kernel slices tile_r rows.
    p_spec = pl.BlockSpec((NC_pad, 1), lambda i, j: (0, 0))

    block_bytes = tile_r * tile_c * x2.dtype.itemsize
    param_bytes = sum(int(p.size) * 4 for p in param_cols)
    # double-buffered in + out blocks, params, ~2 MiB headroom; <= 48 MiB so
    # it is safe on v7x (64 MiB physical per TC) as well as v5e/v6e.
    vmem_limit = int(min(48 * 1024 * 1024,
                         max(16 * 1024 * 1024,
                             4 * block_bytes + 2 * param_bytes + 2 * 1024 * 1024)))

    kernel = _make_chain_kernel(tuple(stage_is_final), tile_r)
    out2 = pl.pallas_call(
        kernel,
        out_shape=jax.ShapeDtypeStruct((NC, HW), dtype),
        grid=(grid_r, grid_c),
        in_specs=[x_spec] + [p_spec] * len(param_cols),
        out_specs=out_spec,
        compiler_params=pltpu.CompilerParams(
            dimension_semantics=("parallel", "parallel"),
            vmem_limit_bytes=vmem_limit,
        ),
    )(x2, *param_cols)

    return out2.reshape(N, C, H, W)


def bitparm_forward(x_nchw, h, b, a=None, final=False):
    """Single Bitparm forward (matches the PyTorch module)."""
    return bitparm_chain_forward(x_nchw, [(h, b, a, final)])


def bitparm_reference(x, h, b, a=None, final=False):
    """Pure-JAX reference matching the PyTorch forward exactly (NCHW)."""
    if final:
        return jax.nn.sigmoid(x * jax.nn.softplus(h) + b)
    t = x * jax.nn.softplus(h) + b
    return t + jnp.tanh(t) * jnp.tanh(a)


if __name__ == "__main__":
    key = jax.random.PRNGKey(0)
    keys = jax.random.split(key, 16)

    N, C, H, W = 2, 4, 16, 16
    x = jax.random.normal(keys[0], (N, C, H, W), dtype=jnp.float32)

    def make_params(k):
        kh, kb, ka = jax.random.split(k, 3)
        h = 0.01 * jax.random.normal(kh, (1, C, 1, 1), dtype=jnp.float32)
        b = 0.01 * jax.random.normal(kb, (1, C, 1, 1), dtype=jnp.float32)
        a = 0.01 * jax.random.normal(ka, (1, C, 1, 1), dtype=jnp.float32)
        return h, b, a

    # --- Single Bitparm, non-final ---
    h1, b1, a1 = make_params(keys[1])
    out = jax.block_until_ready(bitparm_forward(x, h1, b1, a1, final=False))
    ref = bitparm_reference(x, h1, b1, a1, final=False)
    assert out.shape == (N, C, H, W)
    assert jnp.allclose(out, ref, atol=1e-5, rtol=1e-5)

    # --- Single Bitparm, final ---
    out_f = jax.block_until_ready(bitparm_forward(x, h1, b1, final=True))
    ref_f = bitparm_reference(x, h1, b1, final=True)
    assert jnp.allclose(out_f, ref_f, atol=1e-5, rtol=1e-5)

    # --- Fused 4-stage chain (BitEstimator pattern): 3 non-final + 1 final ---
    h2, b2, a2 = make_params(keys[2])
    h3, b3, a3 = make_params(keys[3])
    h4, b4, _ = make_params(keys[4])
    stages = [(h1, b1, a1, False), (h2, b2, a2, False),
              (h3, b3, a3, False), (h4, b4, None, True)]
    out_chain = jax.block_until_ready(bitparm_chain_forward(x, stages))
    ref_chain = x
    for (hh, bb, aa, fin) in stages:
        ref_chain = bitparm_reference(ref_chain, hh, bb, aa, final=fin)
    assert jnp.allclose(out_chain, ref_chain, atol=1e-5, rtol=1e-5)

    # --- Ragged-shape sanity check (HW > lane tile, cdiv-masked edge) ---
    Nr, Cr, Hr, Wr = 1, 4, 48, 48  # HW = 2304 -> tile_c 2048, grid_c 2
    xr = jax.random.normal(keys[5], (Nr, Cr, Hr, Wr), dtype=jnp.float32)
    hr = 0.01 * jax.random.normal(keys[6], (1, Cr, 1, 1), dtype=jnp.float32)
    br = 0.01 * jax.random.normal(keys[7], (1, Cr, 1, 1), dtype=jnp.float32)
    ar = 0.01 * jax.random.normal(keys[8], (1, Cr, 1, 1), dtype=jnp.float32)
    out_r = jax.block_until_ready(bitparm_forward(xr, hr, br, ar, final=False))
    ref_r = bitparm_reference(xr, hr, br, ar, final=False)
    assert jnp.allclose(out_r, ref_r, atol=1e-5, rtol=1e-5)

    print("KERNEL_OK")
</pallas_src>

<mosaic_0001>
module attributes {stable_mosaic.version = 11 : i64} {
  func.func @kernel(%arg0: i32, %arg1: i32, %arg2: memref<8x256xf32, #tpu.memory_space<vmem>>, %arg3: memref<8x1xf32, #tpu.memory_space<vmem>>, %arg4: memref<8x1xf32, #tpu.memory_space<vmem>>, %arg5: memref<8x1xf32, #tpu.memory_space<vmem>>, %arg6: memref<8x256xf32, #tpu.memory_space<vmem>>) attributes {dimension_semantics = [#tpu.dimension_semantics<parallel>, #tpu.dimension_semantics<parallel>], iteration_bounds = array<i64: 1, 1>, scalar_prefetch = 0 : i64, scratch_operands = 0 : i64, tpu.core_type = #tpu.core_type<tc>, window_params = [{transform_indices = @transform_0, window_bounds = array<i64: 8, 256>}, {pipeline_mode = #tpu.pipeline_mode<synchronous>, transform_indices = @transform_1, window_bounds = array<i64: 8, 1>}, {pipeline_mode = #tpu.pipeline_mode<synchronous>, transform_indices = @transform_2, window_bounds = array<i64: 8, 1>}, {pipeline_mode = #tpu.pipeline_mode<synchronous>, transform_indices = @transform_3, window_bounds = array<i64: 8, 1>}, {transform_indices = @transform_4, window_bounds = array<i64: 8, 256>}]} {
    %c8_i32 = arith.constant 8 : i32
    %0 = arith.muli %arg0, %c8_i32 : i32
    %1 = tpu.assume_multiple %0, 8 : i32
    %c0 = arith.constant 0 : index
    %c0_0 = arith.constant 0 : index
    %2 = vector.load %arg2[%c0, %c0_0] : memref<8x256xf32, #tpu.memory_space<vmem>>, vector<8x256xf32>
    %3 = arith.index_cast %1 : i32 to index
    %c0_1 = arith.constant 0 : index
    %4 = vector.load %arg3[%3, %c0_1] : memref<8x1xf32, #tpu.memory_space<vmem>>, vector<8x1xf32>
    %5 = arith.index_cast %1 : i32 to index
    %c0_2 = arith.constant 0 : index
    %6 = vector.load %arg4[%5, %c0_2] : memref<8x1xf32, #tpu.memory_space<vmem>>, vector<8x1xf32>
    %7 = vector.broadcast %4 : vector<8x1xf32> to vector<8x256xf32>
    %8 = arith.mulf %2, %7 : vector<8x256xf32>
    %9 = vector.broadcast %6 : vector<8x1xf32> to vector<8x256xf32>
    %10 = arith.addf %8, %9 : vector<8x256xf32>
    %11 = arith.index_cast %1 : i32 to index
    %c0_3 = arith.constant 0 : index
    %12 = vector.load %arg5[%11, %c0_3] : memref<8x1xf32, #tpu.memory_space<vmem>>, vector<8x1xf32>
    %13 = math.tanh %10 : vector<8x256xf32>
    %14 = vector.broadcast %12 : vector<8x1xf32> to vector<8x256xf32>
    %15 = arith.mulf %13, %14 : vector<8x256xf32>
    %16 = arith.addf %10, %15 : vector<8x256xf32>
    %c0_4 = arith.constant 0 : index
    %c0_5 = arith.constant 0 : index
    %17 = vector.load %arg6[%c0_4, %c0_5] : memref<8x256xf32, #tpu.memory_space<vmem>>, vector<8x256xf32>
    tpu.vector_store %arg6[%c0_4, %c0_5], %16 {strides = array<i32>} : memref<8x256xf32, #tpu.memory_space<vmem>>, vector<8x256xf32>,
    return
  }
  func.func @transform_0(%arg0: i32, %arg1: i32) -> (i32, i32) {
    %c0_i32 = arith.constant 0 : i32
    return %arg0, %arg1 : i32, i32
  }
  func.func @transform_1(%arg0: i32, %arg1: i32) -> (i32, i32) {
    %c0_i32 = arith.constant 0 : i32
    %c0_i32_0 = arith.constant 0 : i32
    %c0_i32_1 = arith.constant 0 : i32
    return %c0_i32, %c0_i32_0 : i32, i32
  }
  func.func @transform_2(%arg0: i32, %arg1: i32) -> (i32, i32) {
    %c0_i32 = arith.constant 0 : i32
    %c0_i32_0 = arith.constant 0 : i32
    %c0_i32_1 = arith.constant 0 : i32
    return %c0_i32, %c0_i32_0 : i32, i32
  }
  func.func @transform_3(%arg0: i32, %arg1: i32) -> (i32, i32) {
    %c0_i32 = arith.constant 0 : i32
    %c0_i32_0 = arith.constant 0 : i32
    %c0_i32_1 = arith.constant 0 : i32
    return %c0_i32, %c0_i32_0 : i32, i32
  }
  func.func @transform_4(%arg0: i32, %arg1: i32) -> (i32, i32) {
    %c0_i32 = arith.constant 0 : i32
    return %arg0, %arg1 : i32, i32
  }
}

</mosaic_0001>

<llo_original>
// kernel: tpu_custom_call.1
$region0: #{tpu_custom_call.1}
  #allocation0 [shape = 'u32[]', space=smem, size = 0x4, offset = 0x4, fixed_abs, tag = 'smem constant byte address 0x4 - core index']
  #allocation1 [shape = 'u32[144,128]{1,0:T(1,128)}', space=vmem, size = 0x12000, scoped, tag = 'internal scratch']
  %s0 = inlined_call_operand.vmem [shape: f32[8,256], index: 0, kind: input, shape index: {}]
  %s1 = inlined_call_operand.vmem [shape: f32[8,1], index: 1, kind: input, shape index: {}]
  %s2 = inlined_call_operand.vmem [shape: f32[8,1], index: 2, kind: input, shape index: {}]
  %s3 = inlined_call_operand.vmem [shape: f32[8,1], index: 3, kind: input, shape index: {}]
  %s4 = inlined_call_operand.hbm [shape: f32[8,256], index: 4, kind: output, shape index: {}]
  %s5 = sld [smem:[#allocation0]]
  $region26: #{tpu_custom_call.1} parent=0
    _
  %s7 = ssub.s32 1, %s5
  %s8 = scalar_select 0, %s7, %s5
  $region1: #{tpu_custom_call.1} parent=0
    #allocation2 [shape = 'u8[8192]{0}', space=vmem, size = 0x2000, scoped, tag = 'output window, operand 0, single buffered']
    #allocation3 [shape = 's32[1]{0}', space=sflag, size = 0x4, scoped, tag = 'scoped memory for tpu_custom_call.1']
    %9 = vsyncpa [#allocation3], 0
    // Predicated region
    $region2: #{tpu_custom_call.1} parent=1 // pred_check
      _
    $region3: #{tpu_custom_call.1} parent=1 // pred_check_branch
      %11 = sbr.rel (0) target = $region5
    $region4: #{tpu_custom_call.1} parent=1 // pred_region
      _
    $region5: #{tpu_custom_call.1} parent=1 // pred_fallthru
      _
    // Predicated region
    $region6: #{tpu_custom_call.1} parent=1 // pred_check
      _
    $region7: #{tpu_custom_call.1} parent=1 // pred_check_branch
      %13 = sbr.rel (0) target = $region9
    $region8: #{tpu_custom_call.1} parent=1 // pred_region
      _
    $region9: #{tpu_custom_call.1} parent=1 // pred_fallthru
      _
    // Predicated region
    $region10: #{tpu_custom_call.1} parent=1 // pred_check
      _
    $region11: #{tpu_custom_call.1} parent=1 // pred_check_branch
      %15 = sbr.rel (0) target = $region13
    $region12: #{tpu_custom_call.1} parent=1 // pred_region
      _
    $region13: #{tpu_custom_call.1} parent=1 // pred_fallthru
      _
    // Predicated region
    $region14: #{tpu_custom_call.1} parent=1 // pred_check
      _
    $region15: #{tpu_custom_call.1} parent=1 // pred_check_branch
      %17 = sbr.rel (0) target = $region17
    $region16: #{tpu_custom_call.1} parent=1 // pred_region
      _
    $region17: #{tpu_custom_call.1} parent=1 // pred_fallthru
      _
    %s18 = smul.u32 0, 8
    %v19 = vld [vmem:[%s0] sm:$0xff]
    %v20 = vld [vmem:[%s0 + $0x8] sm:$0xff]
    %s21 = scalar_lea.vmem %s1, %s18
    %v22 = vld [vmem:[%s21] sm:$0xff]
    %s23 = scalar_lea.vmem %s2, %s18
    %v24 = vld [vmem:[%s23] sm:$0xff]
    %26 = vset.pattern.permute.xlu0 0
    %27 = vperm.xlu0 %26, %v22
    %v28 = vpop.permute.xlu0 %27
    %v30 = vmul.f32 %v19, %v28
    %v31 = vmul.f32 %v20, %v28
    %33 = vset.pattern.permute.xlu0 0
    %34 = vperm.xlu0 %33, %v24
    %v35 = vpop.permute.xlu0 %34
    %v37 = vadd.f32 %v30, %v35
    %v38 = vadd.f32 %v31, %v35
    %s39 = scalar_lea.vmem %s3, %s18
    %v40 = vld [vmem:[%s39] sm:$0xff]
    %v41 = vtanh.pop %v37
    %v42 = vtanh.pop %v38
    %44 = vset.pattern.permute.xlu0 0
    %45 = vperm.xlu0 %44, %v40
    %v46 = vpop.permute.xlu0 %45
    %v48 = vmul.f32 %v41, %v46
    %v49 = vmul.f32 %v42, %v46
    %v50 = vadd.f32 %v37, %v48
    %v51 = vadd.f32 %v38, %v49
    %52 = vst [vmem:[#allocation2] sm:$0xff] %v50
    %53 = vst [vmem:[#allocation2 + $0x8] sm:$0xff] %v51
    // Predicated region
    $region18: #{tpu_custom_call.1} parent=1 // pred_check
      _
    $region19: #{tpu_custom_call.1} parent=1 // pred_check_branch
      %55 = sbr.rel (0) target = $region21
    $region20: #{tpu_custom_call.1} parent=1 // pred_region
      %s57 = ssub.s32 256, 256
      %58 = vsyncadd [#allocation3], %s57
      %s60 = sshll.u32 [#allocation2], 4
      %s61 = int_to_ptr.vmem [resolvable:$true] %s60
      %63 = dma.vmem_to_hbm [thread:$0]  %s61, 256, %s4, [#allocation3]
    $region21: #{tpu_custom_call.1} parent=1 // pred_fallthru
      _
    // Predicated region
    $region22: #{tpu_custom_call.1} parent=1 // pred_check
      _
    $region23: #{tpu_custom_call.1} parent=1 // pred_check_branch
      %65 = sbr.rel (0) target = $region25
    $region24: #{tpu_custom_call.1} parent=1 // pred_region
      %66 = dma.done [#allocation3], 256
    $region25: #{tpu_custom_call.1} parent=1 // pred_fallthru
      _
    %67 = vsyncpa [#allocation3], 1

</llo_original>
